<compile_context>
chip_gen: v7x
topology: tpu7x:2x2x1
jax: 0.10.0
libtpu: 0.0.40
codegen_flags: <defaults>
</compile_context>

<pallas_src>
import functools

import jax
import jax.numpy as jnp
from jax.experimental import pallas as pl
from jax.experimental.pallas import tpu as pltpu

LANES = 128
MAX_TILE_ROWS = 1024   # 1024 x 128 f32 = 512 KiB per input per pipeline buffer
NUM_CORES = 2          # leading "parallel" grid axis (v7x megacore split)


def _dice_kernel(x_ref, t_ref, num_out_ref, tot_out_ref, num_acc, tot_acc,
                 *, ignore_target):
    i = pl.program_id(1)

    @pl.when(i == 0)
    def _():
        num_acc[...] = jnp.zeros_like(num_acc)
        tot_acc[...] = jnp.zeros_like(tot_acc)

    t_native = t_ref[...]
    # Compare in the target's native dtype: no extra full-tile cast just for
    # the mask when targets arrive as int/bf16.
    mask = (t_native != ignore_target).astype(jnp.float32)

    s = jax.nn.sigmoid(x_ref[...].astype(jnp.float32))
    t = t_native.astype(jnp.float32)

    mn = jnp.minimum(s, t) * mask
    tot = (s + t) * mask          # min + max == s + t  ->  den = tot - num

    # Reduce across vregs only (VPU adds); keep the (8,128) lane/sublane shape.
    num_acc[...] += jnp.sum(mn.reshape(-1, 8, LANES), axis=0)
    tot_acc[...] += jnp.sum(tot.reshape(-1, 8, LANES), axis=0)

    @pl.when(i == pl.num_programs(1) - 1)
    def _():
        num_out_ref[0] = num_acc[...]
        tot_out_ref[0] = tot_acc[...]


def _row_granularity(dtype):
    # Sub-32-bit dtypes pack 2x/4x along sublanes -> need 16/32-row multiples.
    return 8 * max(1, 4 // jnp.dtype(dtype).itemsize)


def dice_loss(logits, target, ignore_target=-1):
    """Pallas implementation of DiceLoss.forward. Returns a scalar f32."""
    x = jnp.ravel(logits)
    t = jnp.ravel(target)
    n = x.shape[0]

    gran = max(_row_granularity(x.dtype), _row_granularity(t.dtype))
    rows_needed = pl.cdiv(n, LANES)
    # Biggest tile up to MAX_TILE_ROWS that splits evenly across the two cores.
    tile_rows = min(MAX_TILE_ROWS, pl.cdiv(rows_needed, NUM_CORES * gran) * gran)
    rows = pl.cdiv(rows_needed, tile_rows * NUM_CORES) * tile_rows * NUM_CORES
    steps_per_core = rows // (tile_rows * NUM_CORES)

    pad = rows * LANES - n
    if pad:
        # Pad target with ignore_target so the mask zeroes the padded lanes;
        # padding is skipped entirely when N already fits the tiling.
        x = jnp.pad(x, (0, pad))
        t = jnp.pad(t, (0, pad), constant_values=ignore_target)
    x2 = x.reshape(rows, LANES)
    t2 = t.reshape(rows, LANES)

    kernel = functools.partial(_dice_kernel, ignore_target=ignore_target)

    num_part, tot_part = pl.pallas_call(
        kernel,
        out_shape=(
            jax.ShapeDtypeStruct((NUM_CORES, 8, LANES), jnp.float32),
            jax.ShapeDtypeStruct((NUM_CORES, 8, LANES), jnp.float32),
        ),
        grid_spec=pltpu.PrefetchScalarGridSpec(
            num_scalar_prefetch=0,
            grid=(NUM_CORES, steps_per_core),
            in_specs=[
                pl.BlockSpec((tile_rows, LANES),
                             lambda c, i: (c * steps_per_core + i, 0)),
                pl.BlockSpec((tile_rows, LANES),
                             lambda c, i: (c * steps_per_core + i, 0)),
            ],
            out_specs=[
                pl.BlockSpec((1, 8, LANES), lambda c, i: (c, 0, 0)),
                pl.BlockSpec((1, 8, LANES), lambda c, i: (c, 0, 0)),
            ],
            scratch_shapes=[
                pltpu.VMEM((8, LANES), jnp.float32),  # running sum(min * mask)
                pltpu.VMEM((8, LANES), jnp.float32),  # running sum((s+t)*mask)
            ],
        ),
        # VMEM budget: 2 inputs x 2 pipeline buffers x <=512 KiB tile ~= 2 MiB,
        # well under the default scoped limit on all generations (incl. v7x's
        # 64 MiB physical VMEM), so no explicit vmem_limit_bytes is needed.
        compiler_params=pltpu.CompilerParams(
            dimension_semantics=("parallel", "arbitrary"),
        ),
    )(x2, t2)

    # Tiny final combine: one cross-lane reduce over (2, 8, 128) partials.
    num = jnp.sum(num_part)
    den = jnp.maximum(jnp.sum(tot_part) - num, 1.0)
    return 1.0 - num / den


def dice_loss_ref(logits, target, ignore_target=-1):
    """Pure-JAX reference matching the PyTorch module."""
    x = jax.nn.sigmoid(jnp.ravel(logits).astype(jnp.float32))
    t = jnp.ravel(target).astype(jnp.float32)
    mask = (t != ignore_target).astype(jnp.float32)
    num = jnp.sum(jnp.minimum(x, t) * mask)
    den = jnp.maximum(jnp.sum(jnp.maximum(x, t) * mask), 1.0)
    return 1.0 - num / den


if __name__ == "__main__":
    key = jax.random.PRNGKey(0)
    k1, k2, k3, k4, k5 = jax.random.split(key, 5)

    # The module treats inputs as flat (N,) logits/labels; build them from a
    # small NCHW-shaped tensor (batch=2, channels=4, spatial=16) to mirror a
    # typical segmentation-logit use case.
    shape = (2, 4, 16, 16)  # N = 2048 after flatten
    logits = jax.random.normal(k1, shape, dtype=jnp.float32)
    labels = jax.random.bernoulli(k2, 0.5, shape).astype(jnp.float32)
    # Sprinkle some ignore_target (-1) entries to exercise the mask.
    ignore_mask = jax.random.bernoulli(k3, 0.1, shape)
    labels = jnp.where(ignore_mask, -1.0, labels)

    loss = dice_loss(logits, labels, ignore_target=-1)
    loss = jax.block_until_ready(loss)
    ref = dice_loss_ref(logits, labels, ignore_target=-1)
    assert jnp.allclose(loss, ref, atol=1e-5, rtol=1e-5), (loss, ref)

    # Second case with a ragged N (not a multiple of 128) to exercise the
    # in-wrapper padding + ignore-mask path.
    n_odd = 1000
    logits2 = jax.random.normal(k4, (n_odd,), dtype=jnp.float32)
    labels2 = jax.random.bernoulli(k5, 0.5, (n_odd,)).astype(jnp.float32)
    loss2 = jax.block_until_ready(dice_loss(logits2, labels2, ignore_target=-1))
    ref2 = dice_loss_ref(logits2, labels2, ignore_target=-1)
    assert jnp.allclose(loss2, ref2, atol=1e-5, rtol=1e-5), (loss2, ref2)

    print("KERNEL_OK")
</pallas_src>

<mosaic_0001>
module attributes {stable_mosaic.version = 11 : i64} {
  func.func @_dice_kernel(%arg0: i32, %arg1: i32, %arg2: memref<8x128xf32, #tpu.memory_space<vmem>>, %arg3: memref<8x128xf32, #tpu.memory_space<vmem>>, %arg4: memref<1x8x128xf32, #tpu.memory_space<vmem>>, %arg5: memref<1x8x128xf32, #tpu.memory_space<vmem>>, %arg6: memref<8x128xf32, #tpu.memory_space<vmem>>, %arg7: memref<8x128xf32, #tpu.memory_space<vmem>>) attributes {dimension_semantics = [#tpu.dimension_semantics<parallel>, #tpu.dimension_semantics<arbitrary>], iteration_bounds = array<i64: 2, 1>, scalar_prefetch = 0 : i64, scratch_operands = 2 : i64, tpu.core_type = #tpu.core_type<tc>, window_params = [{transform_indices = @transform_0, window_bounds = array<i64: 8, 128>}, {transform_indices = @transform_1, window_bounds = array<i64: 8, 128>}, {transform_indices = @transform_2, window_bounds = array<i64: 1, 8, 128>}, {transform_indices = @transform_3, window_bounds = array<i64: 1, 8, 128>}]} {
    %c0_i32 = arith.constant 0 : i32
    %0 = arith.cmpi eq, %arg1, %c0_i32 : i32
    %1 = arith.extui %0 : i1 to i32
    %c0_i32_0 = arith.constant 0 : i32
    %2 = arith.cmpi ne, %1, %c0_i32_0 : i32
    scf.if %2 {
      %cst_17 = arith.constant 0.000000e+00 : f32
      %31 = vector.broadcast %cst_17 : f32 to vector<8x128xf32>
      %c0_18 = arith.constant 0 : index
      %c0_19 = arith.constant 0 : index
      %32 = vector.load %arg6[%c0_18, %c0_19] : memref<8x128xf32, #tpu.memory_space<vmem>>, vector<8x128xf32>
      tpu.vector_store %arg6[%c0_18, %c0_19], %31 {strides = array<i32>} : memref<8x128xf32, #tpu.memory_space<vmem>>, vector<8x128xf32>,
      %cst_20 = arith.constant 0.000000e+00 : f32
      %33 = vector.broadcast %cst_20 : f32 to vector<8x128xf32>
      %c0_21 = arith.constant 0 : index
      %c0_22 = arith.constant 0 : index
      %34 = vector.load %arg7[%c0_21, %c0_22] : memref<8x128xf32, #tpu.memory_space<vmem>>, vector<8x128xf32>
      tpu.vector_store %arg7[%c0_21, %c0_22], %33 {strides = array<i32>} : memref<8x128xf32, #tpu.memory_space<vmem>>, vector<8x128xf32>,
    } else {
    }
    %c0 = arith.constant 0 : index
    %c0_1 = arith.constant 0 : index
    %3 = vector.load %arg3[%c0, %c0_1] : memref<8x128xf32, #tpu.memory_space<vmem>>, vector<8x128xf32>
    %cst = arith.constant -1.000000e+00 : f32
    %4 = vector.broadcast %cst : f32 to vector<8x128xf32>
    %5 = arith.cmpf one, %3, %4 : vector<8x128xf32>
    %6 = arith.extui %5 : vector<8x128xi1> to vector<8x128xi32>
    %7 = arith.sitofp %6 : vector<8x128xi32> to vector<8x128xf32>
    %c0_2 = arith.constant 0 : index
    %c0_3 = arith.constant 0 : index
    %8 = vector.load %arg2[%c0_2, %c0_3] : memref<8x128xf32, #tpu.memory_space<vmem>>, vector<8x128xf32>
    %9 = arith.negf %8 : vector<8x128xf32>
    %10 = math.exp %9 : vector<8x128xf32>
    %cst_4 = arith.constant 1.000000e+00 : f32
    %11 = vector.broadcast %cst_4 : f32 to vector<8x128xf32>
    %12 = arith.addf %11, %10 : vector<8x128xf32>
    %13 = arith.divf %11, %12 : vector<8x128xf32>
    %14 = arith.minimumf %13, %3 : vector<8x128xf32>
    %15 = arith.mulf %14, %7 : vector<8x128xf32>
    %16 = arith.addf %13, %3 : vector<8x128xf32>
    %17 = arith.mulf %16, %7 : vector<8x128xf32>
    %c0_5 = arith.constant 0 : index
    %c0_6 = arith.constant 0 : index
    %18 = vector.load %arg6[%c0_5, %c0_6] : memref<8x128xf32, #tpu.memory_space<vmem>>, vector<8x128xf32>
    %19 = vector.shape_cast %15 : vector<8x128xf32> to vector<1x8x128xf32>
    %cst_7 = arith.constant dense<0.000000e+00> : vector<8x128xf32>
    %20 = vector.multi_reduction <add>, %19, %cst_7 [0] : vector<1x8x128xf32> to vector<8x128xf32>
    %21 = arith.addf %18, %20 : vector<8x128xf32>
    %c0_8 = arith.constant 0 : index
    %c0_9 = arith.constant 0 : index
    %22 = vector.load %arg6[%c0_8, %c0_9] : memref<8x128xf32, #tpu.memory_space<vmem>>, vector<8x128xf32>
    tpu.vector_store %arg6[%c0_8, %c0_9], %21 {strides = array<i32>} : memref<8x128xf32, #tpu.memory_space<vmem>>, vector<8x128xf32>,
    %c0_10 = arith.constant 0 : index
    %c0_11 = arith.constant 0 : index
    %23 = vector.load %arg7[%c0_10, %c0_11] : memref<8x128xf32, #tpu.memory_space<vmem>>, vector<8x128xf32>
    %24 = vector.shape_cast %17 : vector<8x128xf32> to vector<1x8x128xf32>
    %cst_12 = arith.constant dense<0.000000e+00> : vector<8x128xf32>
    %25 = vector.multi_reduction <add>, %24, %cst_12 [0] : vector<1x8x128xf32> to vector<8x128xf32>
    %26 = arith.addf %23, %25 : vector<8x128xf32>
    %c0_13 = arith.constant 0 : index
    %c0_14 = arith.constant 0 : index
    %27 = vector.load %arg7[%c0_13, %c0_14] : memref<8x128xf32, #tpu.memory_space<vmem>>, vector<8x128xf32>
    tpu.vector_store %arg7[%c0_13, %c0_14], %26 {strides = array<i32>} : memref<8x128xf32, #tpu.memory_space<vmem>>, vector<8x128xf32>,
    %c0_i32_15 = arith.constant 0 : i32
    %28 = arith.cmpi eq, %arg1, %c0_i32_15 : i32
    %29 = arith.extui %28 : i1 to i32
    %c0_i32_16 = arith.constant 0 : i32
    %30 = arith.cmpi ne, %29, %c0_i32_16 : i32
    scf.if %30 {
      %c0_17 = arith.constant 0 : index
      %c0_18 = arith.constant 0 : index
      %31 = vector.load %arg6[%c0_17, %c0_18] : memref<8x128xf32, #tpu.memory_space<vmem>>, vector<8x128xf32>
      %c0_19 = arith.constant 0 : index
      %c0_20 = arith.constant 0 : index
      %c0_21 = arith.constant 0 : index
      %32 = vector.load %arg4[%c0_19, %c0_20, %c0_21] : memref<1x8x128xf32, #tpu.memory_space<vmem>>, vector<1x8x128xf32>
      %33 = vector.shape_cast %32 : vector<1x8x128xf32> to vector<8x128xf32>
      %34 = vector.shape_cast %31 : vector<8x128xf32> to vector<1x8x128xf32>
      tpu.vector_store %arg4[%c0_19, %c0_20, %c0_21], %34 {strides = array<i32>} : memref<1x8x128xf32, #tpu.memory_space<vmem>>, vector<1x8x128xf32>,
      %c0_22 = arith.constant 0 : index
      %c0_23 = arith.constant 0 : index
      %35 = vector.load %arg7[%c0_22, %c0_23] : memref<8x128xf32, #tpu.memory_space<vmem>>, vector<8x128xf32>
      %c0_24 = arith.constant 0 : index
      %c0_25 = arith.constant 0 : index
      %c0_26 = arith.constant 0 : index
      %36 = vector.load %arg5[%c0_24, %c0_25, %c0_26] : memref<1x8x128xf32, #tpu.memory_space<vmem>>, vector<1x8x128xf32>
      %37 = vector.shape_cast %36 : vector<1x8x128xf32> to vector<8x128xf32>
      %38 = vector.shape_cast %35 : vector<8x128xf32> to vector<1x8x128xf32>
      tpu.vector_store %arg5[%c0_24, %c0_25, %c0_26], %38 {strides = array<i32>} : memref<1x8x128xf32, #tpu.memory_space<vmem>>, vector<1x8x128xf32>,
    } else {
    }
    return
  }
  func.func @transform_0(%arg0: i32, %arg1: i32) -> (i32, i32) {
    %c1_i32 = arith.constant 1 : i32
    %0 = arith.muli %arg0, %c1_i32 : i32
    %1 = arith.addi %0, %arg1 : i32
    %c0_i32 = arith.constant 0 : i32
    %c0_i32_0 = arith.constant 0 : i32
    return %1, %c0_i32 : i32, i32
  }
  func.func @transform_1(%arg0: i32, %arg1: i32) -> (i32, i32) {
    %c1_i32 = arith.constant 1 : i32
    %0 = arith.muli %arg0, %c1_i32 : i32
    %1 = arith.addi %0, %arg1 : i32
    %c0_i32 = arith.constant 0 : i32
    %c0_i32_0 = arith.constant 0 : i32
    return %1, %c0_i32 : i32, i32
  }
  func.func @transform_2(%arg0: i32, %arg1: i32) -> (i32, i32, i32) {
    %c0_i32 = arith.constant 0 : i32
    %c0_i32_0 = arith.constant 0 : i32
    %c0_i32_1 = arith.constant 0 : i32
    return %arg0, %c0_i32, %c0_i32_0 : i32, i32, i32
  }
  func.func @transform_3(%arg0: i32, %arg1: i32) -> (i32, i32, i32) {
    %c0_i32 = arith.constant 0 : i32
    %c0_i32_0 = arith.constant 0 : i32
    %c0_i32_1 = arith.constant 0 : i32
    return %arg0, %c0_i32, %c0_i32_0 : i32, i32, i32
  }
}

</mosaic_0001>

<llo_original>
// kernel: tpu_custom_call.1
$region0: #{tpu_custom_call.1}
  #allocation0 [shape = 'u32[]', space=smem, size = 0x4, offset = 0x4, fixed_abs, tag = 'smem constant byte address 0x4 - core index']
  #allocation1 [shape = 'u32[144,128]{1,0:T(1,128)}', space=vmem, size = 0x12000, scoped, tag = 'internal scratch']
  #allocation2 [shape = 'f32[8,128]{1,0:T(8,128)}', space=vmem, size = 0x1000, scoped, tag = 'scratch operand']
  #allocation3 [shape = 'f32[8,128]{1,0:T(8,128)}', space=vmem, size = 0x1000, scoped, tag = 'scratch operand']
  %s0 = inlined_call_operand.hbm [shape: f32[16,128], index: 0, kind: input, shape index: {}]
  %s1 = inlined_call_operand.hbm [shape: f32[16,128], index: 1, kind: input, shape index: {}]
  %s2 = inlined_call_operand.hbm [shape: f32[2,8,128], index: 2, kind: output, shape index: {0}]
  %s3 = inlined_call_operand.hbm [shape: f32[2,8,128], index: 3, kind: output, shape index: {1}]
  %4 = xla_tuple %s2, %s3
  %s5 = sld [smem:[#allocation0]]
  $region65: #{tpu_custom_call.1} parent=0
    _
  %s7 = ssub.s32 1, %s5
  %s8 = scalar_select 0, %s7, %s5
  $region1: #{tpu_custom_call.1} parent=0
    #allocation4 [shape = 'u8[8192]{0}', space=vmem, size = 0x2000, scoped, tag = 'input window, operand 0']
    #allocation5 [shape = 's32[2]{0}', space=sflag, size = 0x8, scoped, tag = 'scoped memory for tpu_custom_call.1']
    #allocation6 [shape = 's32[2]{0}', space=sflag, size = 0x8, scoped, tag = 'scoped memory for tpu_custom_call.1']
    #allocation7 [shape = 'u8[8192]{0}', space=vmem, size = 0x2000, scoped, tag = 'input window, operand 1']
    #allocation8 [shape = 's32[2]{0}', space=sflag, size = 0x8, scoped, tag = 'scoped memory for tpu_custom_call.1']
    #allocation9 [shape = 'u8[8192]{0}', space=vmem, size = 0x2000, scoped, tag = 'output window, operand 0']
    #allocation10 [shape = 'u8[8192]{0}', space=vmem, size = 0x2000, scoped, tag = 'output window, operand 1']
    #allocation11 [shape = 's32[2]{0}', space=sflag, size = 0x8, scoped, tag = 'scoped memory for tpu_custom_call.1']
    %9 = vsyncpa [#allocation5], 0
    %s10 = scalar_lea.sflag [#allocation5], 1
    %11 = vsyncpa %s10, 0
    %12 = vsyncpa [#allocation8], 0
    %s13 = scalar_lea.sflag [#allocation8], 1
    %14 = vsyncpa %s13, 0
    %15 = vsyncpa [#allocation6], 0
    %s16 = scalar_lea.sflag [#allocation6], 1
    %17 = vsyncpa %s16, 0
    %18 = vsyncpa [#allocation11], 0
    %s19 = scalar_lea.sflag [#allocation11], 1
    %20 = vsyncpa %s19, 0
    loop: start=0, step=1, limit=4
    $region2: #{tpu_custom_call.1} parent=1 // loop_pre_header
      _
    $region3: #{tpu_custom_call.1} parent=1 // loop_header
      %s22 = sphi 0, %s26
      %p23 = scmp.ge.s32.totalorder %s22, 4
      %s29 = sphi 0, %s41
      %s30 = sphi 0, %s37
      %s31 = sphi 0, %s29
      %s32 = sphi 0, %s30
      %s33 = sphi 0, %s31
      %s34 = sphi 0, %s32
      %s46 = sphi 0, %s48
      %s49 = sphi 0, %s46
      %s50 = sphi 0, %s49
      %s66 = sphi 0, %s50
      %s74 = sphi 0, %s76
      %s77 = sphi 0, %s74
      %s78 = sphi 0, %s77
      %s94 = sphi 0, %s78
      %s100 = sphi 0, %s102
      %s103 = sphi 0, %s100
      %s104 = sphi 0, %s103
      %s120 = sphi 0, %s104
      %s126 = sphi 0, %s128
      %s129 = sphi 0, %s126
      %s130 = sphi 0, %s129
      %s146 = sphi 0, %s130
    $region4: #{tpu_custom_call.1} parent=1 // loop_header_branch
      %25 = sbr.rel (%p23) target = $region8
    $region5: #{tpu_custom_call.1} parent=1 // loop_body
      %s27 = ssub.s32 %s22, 1
      %s28 = ssub.s32 %s22, 2
      %s35 = sadd.s32 1, %s30
      %p36 = scmp.ge.s32.totalorder %s35, 1
      %s37 = scalar_select %p36, 0, %s35
      %s38 = sadd.s32 1, %s29
      %s39 = scalar_select %p36, %s38, %s29
      %p40 = scmp.ge.s32.totalorder %s39, 2
      %s41 = scalar_select %p40, 0, %s39
      %s42 = sadd.s32 %s29, %s30
      %s43 = sadd.s32 %s41, %s37
      %s44 = ssub.s32 %s42, %s43
      %p45 = scmp.eq.s32.totalorder %s44, 0
      %s47 = sadd.s32 %s46, 1
      %s48 = scalar_select %p45, %s46, %s47
      %p51 = pneg %p45
      %p52 = scmp.eq.s32.totalorder %s22, 1
      %p53 = por %p51, %p52
      %p54 = scmp.ne.s32.totalorder %s46, %s49
      %p55 = scmp.eq.s32.totalorder %s22, 0
      %p56 = por %p54, %p55
      %p57 = scmp.ne.s32.totalorder %s46, %s49
      %p58 = scmp.eq.s32.totalorder %s27, 1
      %p59 = por %p57, %p58
      %p60 = scmp.ne.s32.totalorder %s49, %s50
      %p61 = scmp.eq.s32.totalorder %s27, 0
      %p62 = por %p60, %p61
      %p63 = scmp.ne.s32.totalorder %s49, %s50
      %p64 = scmp.eq.s32.totalorder %s28, 1
      %p65 = por %p63, %p64
      %p67 = scmp.ne.s32.totalorder %s50, %s66
      %p68 = scmp.eq.s32.totalorder %s28, 0
      %p69 = por %p67, %p68
      %s70 = sadd.s32 %s29, %s30
      %s71 = sadd.s32 %s41, %s37
      %s72 = ssub.s32 %s70, %s71
      %p73 = scmp.eq.s32.totalorder %s72, 0
      %s75 = sadd.s32 %s74, 1
      %s76 = scalar_select %p73, %s74, %s75
      %p79 = pneg %p73
      %p80 = scmp.eq.s32.totalorder %s22, 1
      %p81 = por %p79, %p80
      %p82 = scmp.ne.s32.totalorder %s74, %s77
      %p83 = scmp.eq.s32.totalorder %s22, 0
      %p84 = por %p82, %p83
      %p85 = scmp.ne.s32.totalorder %s74, %s77
      %p86 = scmp.eq.s32.totalorder %s27, 1
      %p87 = por %p85, %p86
      %p88 = scmp.ne.s32.totalorder %s77, %s78
      %p89 = scmp.eq.s32.totalorder %s27, 0
      %p90 = por %p88, %p89
      %p91 = scmp.ne.s32.totalorder %s77, %s78
      %p92 = scmp.eq.s32.totalorder %s28, 1
      %p93 = por %p91, %p92
      %p95 = scmp.ne.s32.totalorder %s78, %s94
      %p96 = scmp.eq.s32.totalorder %s28, 0
      %p97 = por %p95, %p96
      %s98 = ssub.s32 %s29, %s41
      %p99 = scmp.eq.s32.totalorder %s98, 0
      %s101 = sadd.s32 %s100, 1
      %s102 = scalar_select %p99, %s100, %s101
      %p105 = pneg %p99
      %p106 = scmp.eq.s32.totalorder %s22, 1
      %p107 = por %p105, %p106
      %p108 = scmp.ne.s32.totalorder %s100, %s103
      %p109 = scmp.eq.s32.totalorder %s22, 0
      %p110 = por %p108, %p109
      %p111 = scmp.ne.s32.totalorder %s100, %s103
      %p112 = scmp.eq.s32.totalorder %s27, 1
      %p113 = por %p111, %p112
      %p114 = scmp.ne.s32.totalorder %s103, %s104
      %p115 = scmp.eq.s32.totalorder %s27, 0
      %p116 = por %p114, %p115
      %p117 = scmp.ne.s32.totalorder %s103, %s104
      %p118 = scmp.eq.s32.totalorder %s28, 1
      %p119 = por %p117, %p118
      %p121 = scmp.ne.s32.totalorder %s104, %s120
      %p122 = scmp.eq.s32.totalorder %s28, 0
      %p123 = por %p121, %p122
      %s124 = ssub.s32 %s29, %s41
      %p125 = scmp.eq.s32.totalorder %s124, 0
      %s127 = sadd.s32 %s126, 1
      %s128 = scalar_select %p125, %s126, %s127
      %p131 = pneg %p125
      %p132 = scmp.eq.s32.totalorder %s22, 1
      %p133 = por %p131, %p132
      %p134 = scmp.ne.s32.totalorder %s126, %s129
      %p135 = scmp.eq.s32.totalorder %s22, 0
      %p136 = por %p134, %p135
      %p137 = scmp.ne.s32.totalorder %s126, %s129
      %p138 = scmp.eq.s32.totalorder %s27, 1
      %p139 = por %p137, %p138
      %p140 = scmp.ne.s32.totalorder %s129, %s130
      %p141 = scmp.eq.s32.totalorder %s27, 0
      %p142 = por %p140, %p141
      %p143 = scmp.ne.s32.totalorder %s129, %s130
      %p144 = scmp.eq.s32.totalorder %s28, 1
      %p145 = por %p143, %p144
      %p147 = scmp.ne.s32.totalorder %s130, %s146
      %p148 = scmp.eq.s32.totalorder %s28, 0
      %p149 = por %p147, %p148
      %p150 = scmp.le.s32.totalorder 1, %s22
      %p151 = scmp.lt.s32.totalorder %s22, 3
      %p152 = pnand %p150, %p151
      %p153 = pneg %p152
      // Predicated region
      $region9: #{tpu_custom_call.1} parent=5 // pred_check
        _
      $region10: #{tpu_custom_call.1} parent=5 // pred_check_branch
        %155 = sbr.rel (%p152) target = $region12
      $region11: #{tpu_custom_call.1} parent=5 // pred_region
        %s156 = ssub.s32 %s22, 1
      $region12: #{tpu_custom_call.1} parent=5 // pred_fallthru
        _
      %p157 = scmp.lt.s32.totalorder %s22, 2
      // Predicated region
      $region13: #{tpu_custom_call.1} parent=5 // pred_check
        %p158 = pneg %p157
      $region14: #{tpu_custom_call.1} parent=5 // pred_check_branch
        %160 = sbr.rel (%p158) target = $region16
      $region15: #{tpu_custom_call.1} parent=5 // pred_region
        // Predicated region
        $region17: #{tpu_custom_call.1} parent=15 // pred_check
          %p161 = pneg %p56
        $region18: #{tpu_custom_call.1} parent=15 // pred_check_branch
          %163 = sbr.rel (%p161) target = $region20
        $region19: #{tpu_custom_call.1} parent=15 // pred_region
          %s164 = sand.u32 %s46, 1
          %s165 = scalar_lea.sflag [#allocation5], %s164
          %s166 = sand.u32 %s46, 1
          %s167 = smul.addr %s166, 8
          %s168 = scalar_lea.vmem [#allocation4], %s167
          %s169 = sadd.s32 %s29, %s30
          %s171 = ssub.s32 128, 128
          %172 = vsyncadd %s165, %s171
          %s173 = smul.addr %s169, 128
          %s174 = scalar_lea.hbm %s0, %s173
          %s176 = sshll.u32 %s168, 4
          %s177 = int_to_ptr.vmem [resolvable:$true] %s176
          %179 = dma.hbm_to_vmem [thread:$0]  %s174, 128, %s177, %s165
        $region20: #{tpu_custom_call.1} parent=15 // pred_fallthru
          _
        // Predicated region
        $region21: #{tpu_custom_call.1} parent=15 // pred_check
          %p180 = pneg %p84
        $region22: #{tpu_custom_call.1} parent=15 // pred_check_branch
          %182 = sbr.rel (%p180) target = $region24
        $region23: #{tpu_custom_call.1} parent=15 // pred_region
          %s183 = sand.u32 %s74, 1
          %s184 = scalar_lea.sflag [#allocation8], %s183
          %s185 = sand.u32 %s74, 1
          %s186 = smul.addr %s185, 8
          %s187 = scalar_lea.vmem [#allocation7], %s186
          %s188 = sadd.s32 %s29, %s30
          %s190 = ssub.s32 128, 128
          %191 = vsyncadd %s184, %s190
          %s192 = smul.addr %s188, 128
          %s193 = scalar_lea.hbm %s1, %s192
          %s195 = sshll.u32 %s187, 4
          %s196 = int_to_ptr.vmem [resolvable:$true] %s195
          %198 = dma.hbm_to_vmem [thread:$0]  %s193, 128, %s196, %s184
        $region24: #{tpu_custom_call.1} parent=15 // pred_fallthru
          _
      $region16: #{tpu_custom_call.1} parent=5 // pred_fallthru
        _
      %p199 = scmp.le.s32.totalorder 1, %s22
      %p200 = scmp.lt.s32.totalorder %s22, 3
      %p201 = pnand %p199, %p200
      %p202 = pneg %p201
      // Predicated region
      $region25: #{tpu_custom_call.1} parent=5 // pred_check
        _
      $region26: #{tpu_custom_call.1} parent=5 // pred_check_branch
        %204 = sbr.rel (%p201) target = $region28
      $region27: #{tpu_custom_call.1} parent=5 // pred_region
        %s205 = ssub.s32 %s22, 1
        %s206 = sand.u32 %s49, 1
        %s207 = scalar_lea.sflag [#allocation5], %s206
        %s208 = sand.u32 %s49, 1
        %s209 = smul.addr %s208, 8
        %s210 = scalar_lea.vmem [#allocation4], %s209
        // Predicated region
        $region29: #{tpu_custom_call.1} parent=27 // pred_check
          %p211 = pneg %p62
        $region30: #{tpu_custom_call.1} parent=27 // pred_check_branch
          %213 = sbr.rel (%p211) target = $region32
        $region31: #{tpu_custom_call.1} parent=27 // pred_region
          %214 = dma.done %s207, 128
        $region32: #{tpu_custom_call.1} parent=27 // pred_fallthru
          _
        %s215 = sand.u32 %s77, 1
        %s216 = scalar_lea.sflag [#allocation8], %s215
        %s217 = sand.u32 %s77, 1
        %s218 = smul.addr %s217, 8
        %s219 = scalar_lea.vmem [#allocation7], %s218
        // Predicated region
        $region33: #{tpu_custom_call.1} parent=27 // pred_check
          %p220 = pneg %p90
        $region34: #{tpu_custom_call.1} parent=27 // pred_check_branch
          %222 = sbr.rel (%p220) target = $region36
        $region35: #{tpu_custom_call.1} parent=27 // pred_region
          %223 = dma.done %s216, 128
        $region36: #{tpu_custom_call.1} parent=27 // pred_fallthru
          _
        %s224 = sand.u32 %s49, 1
        %s225 = scalar_lea.sflag [#allocation5], %s224
        %s226 = sand.u32 %s49, 1
        %s227 = smul.addr %s226, 8
        %s228 = scalar_lea.vmem [#allocation4], %s227
        %p229 = pneg %p62
        %p230 = pneg %p59
        %s231 = sand.u32 %s77, 1
        %s232 = scalar_lea.sflag [#allocation8], %s231
        %s233 = sand.u32 %s77, 1
        %s234 = smul.addr %s233, 8
        %s235 = scalar_lea.vmem [#allocation7], %s234
        %p236 = pneg %p90
        %p237 = pneg %p87
        %p238 = pneg %p116
        %p239 = pneg %p113
        %s240 = sand.u32 %s103, 1
        %s241 = scalar_lea.sflag [#allocation6], %s240
        %s242 = sand.u32 %s103, 1
        %s243 = smul.addr %s242, 8
        %s244 = scalar_lea.vmem [#allocation9], %s243
        %p245 = pneg %p142
        %p246 = pneg %p139
        %s247 = sand.u32 %s129, 1
        %s248 = scalar_lea.sflag [#allocation11], %s247
        %s249 = sand.u32 %s129, 1
        %s250 = smul.addr %s249, 8
        %s251 = scalar_lea.vmem [#allocation10], %s250
        %s252 = sadd.s32 %s31, %s32
        %s253 = sadd.s32 %s31, %s32
        %p254 = scmp.eq.s32.totalorder %s32, 0
        // Predicated region
        $region37: #{tpu_custom_call.1} parent=27 // pred_check
          %p255 = pneg %p254
        $region38: #{tpu_custom_call.1} parent=27 // pred_check_branch
          %257 = sbr.rel (%p255) target = $region40
        $region39: #{tpu_custom_call.1} parent=27 // pred_region
          %258 = vst [vmem:[#allocation2] sm:$0xff] 0.0
          %259 = vst [vmem:[#allocation3] sm:$0xff] 0.0
        $region40: #{tpu_custom_call.1} parent=27 // pred_fallthru
          _
        %v260 = vld [vmem:[%s219] sm:$0xff]
        %vm261 = vcmp.ne.f32.partialorder %v260, -1.0
        %v262 = vsel %vm261, 1, 0
        %v263 = vcvt.s32.f32 %v262
        %v264 = vld [vmem:[%s210] sm:$0xff]
        %v265 = vxor.u32 %v264, 2147483648
        %v266 = vmul.f32 %v265, 1.442695
        %v267 = vpow.pop %v266
        %v268 = vadd.f32 %v267, 1.0
        %v269 = vrcp.pop %v268
        %v270 = vmul.f32 1.0, %v269
        %v271 = vmin.f32 %v270, %v260
        %v272 = vmul.f32 %v271, %v263
        %v273 = vadd.f32 %v270, %v260
        %v274 = vmul.f32 %v273, %v263
        %v275 = vld [vmem:[#allocation2] sm:$0xff]
        %v276 = vadd.f32 %v272, 0.0
        %v277 = vadd.f32 %v275, %v276
        %278 = vst [vmem:[#allocation2] sm:$0xff] %v277
        %v279 = vld [vmem:[#allocation3] sm:$0xff]
        %v280 = vadd.f32 %v274, 0.0
        %v281 = vadd.f32 %v279, %v280
        %282 = vst [vmem:[#allocation3] sm:$0xff] %v281
        // Predicated region
        $region41: #{tpu_custom_call.1} parent=27 // pred_check
          %p283 = pneg %p254
        $region42: #{tpu_custom_call.1} parent=27 // pred_check_branch
          %285 = sbr.rel (%p283) target = $region44
        $region43: #{tpu_custom_call.1} parent=27 // pred_region
          %v286 = vld [vmem:[#allocation2] sm:$0xff]
          %287 = vst [vmem:[%s244] sm:$0xff] %v286
          %v288 = vld [vmem:[#allocation3] sm:$0xff]
          %289 = vst [vmem:[%s251] sm:$0xff] %v288
        $region44: #{tpu_custom_call.1} parent=27 // pred_fallthru
          _
        %s290 = sand.u32 %s103, 1
        %s291 = scalar_lea.sflag [#allocation6], %s290
        %s292 = sand.u32 %s103, 1
        %s293 = smul.addr %s292, 8
        %s294 = scalar_lea.vmem [#allocation9], %s293
        %s295 = sand.u32 %s129, 1
        %s296 = scalar_lea.sflag [#allocation11], %s295
        %s297 = sand.u32 %s129, 1
        %s298 = smul.addr %s297, 8
        %s299 = scalar_lea.vmem [#allocation10], %s298
        // Predicated region
        $region45: #{tpu_custom_call.1} parent=27 // pred_check
          %p300 = pneg %p113
        $region46: #{tpu_custom_call.1} parent=27 // pred_check_branch
          %302 = sbr.rel (%p300) target = $region48
        $region47: #{tpu_custom_call.1} parent=27 // pred_region
          %s304 = ssub.s32 128, 128
          %305 = vsyncadd %s291, %s304
          %s306 = smul.addr %s31, 128
          %s307 = scalar_lea.hbm %s2, %s306
          %s309 = sshll.u32 %s294, 4
          %s310 = int_to_ptr.vmem [resolvable:$true] %s309
          %312 = dma.vmem_to_hbm [thread:$0]  %s310, 128, %s307, %s291
        $region48: #{tpu_custom_call.1} parent=27 // pred_fallthru
          _
        // Predicated region
        $region49: #{tpu_custom_call.1} parent=27 // pred_check
          %p313 = pneg %p139
        $region50: #{tpu_custom_call.1} parent=27 // pred_check_branch
          %315 = sbr.rel (%p313) target = $region52
        $region51: #{tpu_custom_call.1} parent=27 // pred_region
          %s317 = ssub.s32 128, 128
          %318 = vsyncadd %s296, %s317
          %s319 = smul.addr %s31, 128
          %s320 = scalar_lea.hbm %s3, %s319
          %s322 = sshll.u32 %s299, 4
          %s323 = int_to_ptr.vmem [resolvable:$true] %s322
          %325 = dma.vmem_to_hbm [thread:$0]  %s323, 128, %s320, %s296
        $region52: #{tpu_custom_call.1} parent=27 // pred_fallthru
          _
      $region28: #{tpu_custom_call.1} parent=5 // pred_fallthru
        _
      %p326 = scmp.le.s32.totalorder 2, %s22
      // Predicated region
      $region53: #{tpu_custom_call.1} parent=5 // pred_check
        %p327 = pneg %p326
      $region54: #{tpu_custom_call.1} parent=5 // pred_check_branch
        %329 = sbr.rel (%p327) target = $region56
      $region55: #{tpu_custom_call.1} parent=5 // pred_region
        %s330 = ssub.s32 %s22, 2
        // Predicated region
        $region57: #{tpu_custom_call.1} parent=55 // pred_check
          %p331 = pneg %p119
        $region58: #{tpu_custom_call.1} parent=55 // pred_check_branch
          %333 = sbr.rel (%p331) target = $region60
        $region59: #{tpu_custom_call.1} parent=55 // pred_region
          %s334 = sand.u32 %s104, 1
          %s335 = scalar_lea.sflag [#allocation6], %s334
          %s336 = sand.u32 %s104, 1
          %s337 = smul.addr %s336, 8
          %s338 = scalar_lea.vmem [#allocation9], %s337
          %339 = dma.done %s335, 128
        $region60: #{tpu_custom_call.1} parent=55 // pred_fallthru
          _
        // Predicated region
        $region61: #{tpu_custom_call.1} parent=55 // pred_check
          %p340 = pneg %p145
        $region62: #{tpu_custom_call.1} parent=55 // pred_check_branch
          %342 = sbr.rel (%p340) target = $region64
        $region63: #{tpu_custom_call.1} parent=55 // pred_region
          %s343 = sand.u32 %s130, 1
          %s344 = scalar_lea.sflag [#allocation11], %s343
          %s345 = sand.u32 %s130, 1
          %s346 = smul.addr %s345, 8
          %s347 = scalar_lea.vmem [#allocation10], %s346
          %348 = dma.done %s344, 128
        $region64: #{tpu_custom_call.1} parent=55 // pred_fallthru
          _
      $region56: #{tpu_custom_call.1} parent=5 // pred_fallthru
        _
    $region6: #{tpu_custom_call.1} parent=1 // loop_footer
      %s26 = sadd.s32 1, %s22
    $region7: #{tpu_custom_call.1} parent=1 // loop_footer_branch
      %21 = sbr.rel target = $region3
    $region8: #{tpu_custom_call.1} parent=1 // loop_exit
      _
    %349 = vsyncpa [#allocation5], 1
    %s350 = scalar_lea.sflag [#allocation5], 1
    %351 = vsyncpa %s350, 1
    %352 = vsyncpa [#allocation8], 1
    %s353 = scalar_lea.sflag [#allocation8], 1
    %354 = vsyncpa %s353, 1
    %355 = vsyncpa [#allocation6], 1
    %s356 = scalar_lea.sflag [#allocation6], 1
    %357 = vsyncpa %s356, 1
    %358 = vsyncpa [#allocation11], 1
    %s359 = scalar_lea.sflag [#allocation11], 1
    %360 = vsyncpa %s359, 1

</llo_original>
